<compile_context>
chip_gen: v5e
topology: v5e:2x2
jax: 0.10.0
libtpu: 0.0.40
codegen_flags: <defaults>
</compile_context>

<pallas_src>
import functools

import jax
import jax.numpy as jnp
from jax import lax
from jax.experimental import pallas as pl
from jax.experimental.pallas import tpu as pltpu


def _ntxent_kernel(keys_ref, q1t_ref, q2t_ref, loss_ref, *,
                   key_chunk, inv_tau, use_bf16_matmul):
    """One grid step: per-sample loss for T query rows against all 2B keys.

    keys_ref : (2B, D)  normalized, tau-scaled [zn1; zn2] (resident, single buffer)
    q1t_ref  : (D, T)   this tile's columns of zn1^T (query operand, pre-transposed)
    q2t_ref  : (D, T)   this tile's columns of zn2^T
    loss_ref : (1, T)   per-sample loss (lane-dense)
    """
    n_keys = keys_ref.shape[0]                       # 2B
    T = q1t_ref.shape[1]
    num_chunks = n_keys // key_chunk
    shift = inv_tau                                  # max possible logit (cos sim <= 1)

    q1 = q1t_ref[...].astype(jnp.float32)            # (D, T)
    q2 = q2t_ref[...].astype(jnp.float32)
    # Fused query operand: one (chunk, D) @ (D, 2T) matmul per key chunk instead of
    # four separate (chunk, D) @ (D, T) contractions.
    qcat = jnp.concatenate([q1, q2], axis=1)         # (D, 2T)
    if use_bf16_matmul:
        qcat = qcat.astype(jnp.bfloat16)

    def chunk_colsum(start):
        kblk = keys_ref[pl.ds(start, key_chunk), :]                    # (chunk, D)
        if use_bf16_matmul:
            kblk = kblk.astype(jnp.bfloat16)
        s = jnp.dot(kblk, qcat, preferred_element_type=jnp.float32)    # (chunk, 2T) MXU
        # Shifted exp (<= 0 exponents) + column sum -> (1, 2T) partial denominators.
        return jnp.sum(jnp.exp(s - shift), axis=0, keepdims=True)

    acc0 = jnp.zeros((1, 2 * T), dtype=jnp.float32)
    if num_chunks <= 4:
        # Short fixed trip count: static unroll (full LLO visibility).
        acc = acc0
        for c in range(num_chunks):
            acc = acc + chunk_colsum(c * key_chunk)
    else:
        acc = lax.fori_loop(
            0, num_chunks,
            lambda c, a: a + chunk_colsum(pl.multiple_of(c * key_chunk, key_chunk)),
            acc0)

    # Positive logits s12[i, i] (already / tau via the folded normalization) -- computed
    # directly from the query tiles, no diagonal masks and no exp/log round trip.
    p_logit = jnp.sum(q1 * q2, axis=0, keepdims=True)                  # (1, T)
    pos = jnp.exp(p_logit - shift)

    # Only the positive pair is removed; the exp(1/tau) self term stays (module semantics).
    neg_top = acc[:, :T] - pos       # rows of the top half (queries = zn1 tile)
    neg_bot = acc[:, T:] - pos       # rows of the bottom half (queries = zn2 tile)

    # loss_i = (-log(pos/neg_top) - log(pos/neg_bot)) / (2B), with the shift folded back.
    loss_ref[...] = (jnp.log(neg_top) + jnp.log(neg_bot) + 2.0 * shift
                     - 2.0 * p_logit) * (1.0 / n_keys)


def _tpu_params():
    """(preferred query-row tile, vmem_limit_bytes) for the local TPU generation."""
    preferred_tile = 256                     # v6e / v7x: 2x256^2 MXUs
    vmem_bytes = 64 * 1024 * 1024            # conservative default if introspection fails
    try:
        kind = jax.devices()[0].device_kind.lower()
        if ("v5 lite" in kind) or ("v5e" in kind) or ("v5lite" in kind):
            preferred_tile = 128             # v5e: 4x128^2 MXUs
    except Exception:
        pass
    try:
        vmem_bytes = int(pltpu.get_tpu_info().vmem_capacity_bytes)
    except Exception:
        pass
    return preferred_tile, int(0.75 * vmem_bytes)


def _row_tile(batch, preferred):
    """MXU-aligned query-row tile.  Blocks need T % 128 == 0 or T == batch.
    Prefer an even grid with >= 2 steps so v7x's two TensorCores both get work."""
    cands = [t for t in dict.fromkeys((preferred, 256, 128)) if batch % t == 0]
    for t in cands:
        n = batch // t
        if n >= 2 and n % 2 == 0:
            return t
    for t in cands:
        if batch // t >= 2:
            return t
    if cands:
        return cands[0]
    return batch                             # small / odd batch: single whole-batch tile


def _key_chunk(n_keys):
    """Rows of the key axis processed per inner step (bounds (chunk, 2T) temporaries)."""
    for kc in (512, 1024, 256, 128, 64, 32, 16, 8):
        if n_keys % kc == 0:
            return kc
    return n_keys


def ntxent_loss(z1, z2, temperature=0.1, use_bf16_matmul=False):
    """Pallas NT-Xent loss.  z1, z2: (B, D) arrays.  Returns per-sample loss (B,), f32."""
    assert z1.shape == z2.shape and z1.ndim == 2
    B, D = z1.shape
    inv_tau = 1.0 / float(temperature)
    inv_sqrt_tau = float(temperature) ** -0.5

    # F.normalize(p=2, dim=1, eps=1e-12) fused with the later "/ tau": done ONCE here and
    # reused for both the key role and the (transposed) query role.
    def _prep(x):
        x = x.astype(jnp.float32)
        ss = jnp.sum(x * x, axis=1, keepdims=True)
        return x * (lax.rsqrt(jnp.maximum(ss, 1e-24)) * inv_sqrt_tau)

    zn1 = _prep(z1)
    zn2 = _prep(z2)
    zcat = jnp.concatenate([zn1, zn2], axis=0)       # (2B, D) resident keys
    # Layout plumbing: queries presented pre-transposed so every in-kernel contraction is
    # a clean (chunk, D) @ (D, 2T) MXU matmul with no operand transpose.
    z1t = jnp.swapaxes(zn1, 0, 1)                    # (D, B)
    z2t = jnp.swapaxes(zn2, 0, 1)

    tile_pref, vmem_limit = _tpu_params()
    T = _row_tile(B, tile_pref)
    KC = _key_chunk(2 * B)
    grid = (B // T,)
    # TODO(synk): for B*D too large for resident keys in VMEM, add a second ("arbitrary")
    # grid axis over key blocks with scratch accumulation of the column sums.

    kernel = functools.partial(_ntxent_kernel, key_chunk=KC, inv_tau=inv_tau,
                               use_bf16_matmul=use_bf16_matmul)

    def _run(key_pipeline_mode):
        kw = {} if key_pipeline_mode is None else {"pipeline_mode": key_pipeline_mode}
        return pl.pallas_call(
            kernel,
            out_shape=jax.ShapeDtypeStruct((1, B), jnp.float32),
            grid_spec=pltpu.PrefetchScalarGridSpec(
                num_scalar_prefetch=0,
                grid=grid,
                in_specs=[
                    # Resident keys: constant block index -> a single buffer suffices.
                    pl.BlockSpec((2 * B, D), lambda i: (0, 0), **kw),
                    pl.BlockSpec((D, T), lambda i: (0, i)),    # zn1^T query tile
                    pl.BlockSpec((D, T), lambda i: (0, i)),    # zn2^T query tile
                ],
                out_specs=pl.BlockSpec((1, T), lambda i: (0, i)),
            ),
            compiler_params=pltpu.CompilerParams(
                # Row tiles are independent -> v7x's two TensorCores split them;
                # harmless on single-TC v5e/v6e.
                dimension_semantics=("parallel",),
                vmem_limit_bytes=vmem_limit,
            ),
        )(zcat, z1t, z2t)

    try:
        out = _run(pl.Buffered(1))
    except Exception:
        # Fallback for jax versions without BlockSpec.pipeline_mode / Buffered(1).
        out = _run(None)
    return out.reshape(B)


def _ntxent_reference(z1, z2, temperature=0.1):
    """Pure-JAX re-implementation of the PyTorch forward (for verification)."""
    B = z1.shape[0]
    N = 2 * B

    def l2norm(x):
        return x / jnp.maximum(jnp.linalg.norm(x, axis=1, keepdims=True), 1e-12)

    z = jnp.concatenate([l2norm(z1), l2norm(z2)], axis=0)
    S = jnp.exp((z @ z.T) / temperature)
    idx = jnp.arange(N)
    mask = (idx[None, :] == ((idx[:, None] - B) % N))
    pos = jnp.sum(jnp.where(mask, S, 0.0), axis=1)
    neg = jnp.sum(S, axis=1) - pos
    pairs_loss = -jnp.log(pos / neg)
    return (pairs_loss[:B] + pairs_loss[B:]) / N


if __name__ == "__main__":
    key = jax.random.PRNGKey(0)
    k1, k2, k3, k4 = jax.random.split(key, 4)

    # Small shapes consistent with the module: batch=8 pairs, hidden=32.
    B, D = 8, 32
    z1 = jax.random.normal(k1, (B, D), dtype=jnp.float32)
    z2 = jax.random.normal(k2, (B, D), dtype=jnp.float32)
    loss = jax.block_until_ready(ntxent_loss(z1, z2, temperature=0.1))
    ref = jax.block_until_ready(_ntxent_reference(z1, z2, temperature=0.1))
    assert loss.shape == (B,)
    assert jnp.allclose(loss, ref, rtol=1e-5, atol=1e-5), (loss, ref)

    # Exercise the tiled / parallel grid path and in-kernel key chunking.
    B2, D2 = 512, 64
    a1 = jax.random.normal(k3, (B2, D2), dtype=jnp.float32)
    a2 = jax.random.normal(k4, (B2, D2), dtype=jnp.float32)
    loss2 = jax.block_until_ready(ntxent_loss(a1, a2, temperature=0.1))
    ref2 = jax.block_until_ready(_ntxent_reference(a1, a2, temperature=0.1))
    assert loss2.shape == (B2,)
    assert jnp.allclose(loss2, ref2, rtol=1e-5, atol=1e-5), (loss2, ref2)

    # Opt-in reduced-precision MXU path (bf16 operands, f32 accumulate / exp / log).
    loss_bf16 = jax.block_until_ready(
        ntxent_loss(a1, a2, temperature=0.1, use_bf16_matmul=True))
    assert loss_bf16.shape == (B2,)
    assert bool(jnp.all(jnp.isfinite(loss_bf16)))
    assert jnp.allclose(loss_bf16, ref2, rtol=5e-2, atol=5e-2)

    print("KERNEL_OK")
</pallas_src>

<mosaic_0001>
module attributes {stable_mosaic.version = 11 : i64} {
  func.func @_ntxent_kernel(%arg0: i32, %arg1: memref<16x32xf32, #tpu.memory_space<vmem>>, %arg2: memref<32x8xf32, #tpu.memory_space<vmem>>, %arg3: memref<32x8xf32, #tpu.memory_space<vmem>>, %arg4: memref<1x8xf32, #tpu.memory_space<vmem>>) attributes {dimension_semantics = [#tpu.dimension_semantics<parallel>], iteration_bounds = array<i64: 1>, scalar_prefetch = 0 : i64, scratch_operands = 0 : i64, tpu.core_type = #tpu.core_type<tc>, window_params = [{pipeline_mode = #tpu.pipeline_mode<synchronous>, transform_indices = @transform_0, window_bounds = array<i64: 16, 32>}, {transform_indices = @transform_1, window_bounds = array<i64: 32, 8>}, {transform_indices = @transform_2, window_bounds = array<i64: 32, 8>}, {transform_indices = @transform_3, window_bounds = array<i64: 1, 8>}]} {
    %c0 = arith.constant 0 : index
    %c0_0 = arith.constant 0 : index
    %0 = vector.load %arg2[%c0, %c0_0] : memref<32x8xf32, #tpu.memory_space<vmem>>, vector<32x8xf32>
    %c0_1 = arith.constant 0 : index
    %c0_2 = arith.constant 0 : index
    %1 = vector.load %arg3[%c0_1, %c0_2] : memref<32x8xf32, #tpu.memory_space<vmem>>, vector<32x8xf32>
    %2 = tpu.concatenate %0, %1 in 1 : vector<32x8xf32>, vector<32x8xf32> -> vector<32x16xf32>
    %cst = arith.constant 0.000000e+00 : f32
    %3 = vector.broadcast %cst : f32 to vector<1x16xf32>
    %c0_3 = arith.constant 0 : index
    %c0_4 = arith.constant 0 : index
    %4 = vector.load %arg1[%c0_3, %c0_4] : memref<16x32xf32, #tpu.memory_space<vmem>>, vector<16x32xf32>
    %cst_5 = arith.constant dense<0.000000e+00> : vector<16x16xf32>
    %5 = tpu.matmul %4, %2, %cst_5 {dimension_numbers = #tpu.dot_dimension_numbers<[1], [0], [0], [1], [0, 0, 1, 1], [], []>} : vector<16x32xf32>, vector<32x16xf32>, vector<16x16xf32> -> vector<16x16xf32>
    %cst_6 = arith.constant 1.000000e+01 : f32
    %6 = vector.broadcast %cst_6 : f32 to vector<16x16xf32>
    %7 = arith.subf %5, %6 : vector<16x16xf32>
    %8 = math.exp %7 : vector<16x16xf32>
    %cst_7 = arith.constant dense<0.000000e+00> : vector<16xf32>
    %9 = vector.multi_reduction <add>, %8, %cst_7 [0] : vector<16x16xf32> to vector<16xf32>
    %10 = vector.shape_cast %9 : vector<16xf32> to vector<1x16xf32>
    %11 = arith.addf %3, %10 : vector<1x16xf32>
    %12 = arith.mulf %0, %1 : vector<32x8xf32>
    %cst_8 = arith.constant dense<0.000000e+00> : vector<8xf32>
    %13 = vector.multi_reduction <add>, %12, %cst_8 [0] : vector<32x8xf32> to vector<8xf32>
    %14 = vector.shape_cast %13 : vector<8xf32> to vector<1x8xf32>
    %cst_9 = arith.constant 1.000000e+01 : f32
    %15 = vector.broadcast %cst_9 : f32 to vector<1x8xf32>
    %16 = arith.subf %14, %15 : vector<1x8xf32>
    %17 = math.exp %16 : vector<1x8xf32>
    %18 = vector.extract_strided_slice %11 {offsets = [0, 0], sizes = [1, 8], strides = [1, 1]} : vector<1x16xf32> to vector<1x8xf32>
    %19 = arith.subf %18, %17 : vector<1x8xf32>
    %20 = vector.extract_strided_slice %11 {offsets = [0, 8], sizes = [1, 8], strides = [1, 1]} : vector<1x16xf32> to vector<1x8xf32>
    %21 = arith.subf %20, %17 : vector<1x8xf32>
    %22 = math.log %19 : vector<1x8xf32>
    %23 = math.log %21 : vector<1x8xf32>
    %24 = arith.addf %22, %23 : vector<1x8xf32>
    %cst_10 = arith.constant 2.000000e+01 : f32
    %25 = vector.broadcast %cst_10 : f32 to vector<1x8xf32>
    %26 = arith.addf %24, %25 : vector<1x8xf32>
    %cst_11 = arith.constant 2.000000e+00 : f32
    %27 = vector.broadcast %cst_11 : f32 to vector<1x8xf32>
    %28 = arith.mulf %27, %14 : vector<1x8xf32>
    %29 = arith.subf %26, %28 : vector<1x8xf32>
    %cst_12 = arith.constant 6.250000e-02 : f32
    %30 = vector.broadcast %cst_12 : f32 to vector<1x8xf32>
    %31 = arith.mulf %29, %30 : vector<1x8xf32>
    %c0_13 = arith.constant 0 : index
    %c0_14 = arith.constant 0 : index
    %32 = vector.load %arg4[%c0_13, %c0_14] : memref<1x8xf32, #tpu.memory_space<vmem>>, vector<1x8xf32>
    tpu.vector_store %arg4[%c0_13, %c0_14], %31 {strides = array<i32>} : memref<1x8xf32, #tpu.memory_space<vmem>>, vector<1x8xf32>,
    return
  }
  func.func @transform_0(%arg0: i32) -> (i32, i32) {
    %c0_i32 = arith.constant 0 : i32
    %c0_i32_0 = arith.constant 0 : i32
    %c0_i32_1 = arith.constant 0 : i32
    return %c0_i32, %c0_i32_0 : i32, i32
  }
  func.func @transform_1(%arg0: i32) -> (i32, i32) {
    %c0_i32 = arith.constant 0 : i32
    %c0_i32_0 = arith.constant 0 : i32
    return %c0_i32, %arg0 : i32, i32
  }
  func.func @transform_2(%arg0: i32) -> (i32, i32) {
    %c0_i32 = arith.constant 0 : i32
    %c0_i32_0 = arith.constant 0 : i32
    return %c0_i32, %arg0 : i32, i32
  }
  func.func @transform_3(%arg0: i32) -> (i32, i32) {
    %c0_i32 = arith.constant 0 : i32
    %c0_i32_0 = arith.constant 0 : i32
    return %c0_i32, %arg0 : i32, i32
  }
}

module attributes {stable_mosaic.version = 11 : i64} {
  func.func @_ntxent_kernel(%arg0: i32, %arg1: memref<16x32xf32, #tpu.memory_space<vmem>>, %arg2: memref<32x8xf32, #tpu.memory_space<vmem>>, %arg3: memref<32x8xf32, #tpu.memory_space<vmem>>, %arg4: memref<1x8xf32, #tpu.memory_space<vmem>>) attributes {dimension_semantics = [#tpu.dimension_semantics<parallel>], iteration_bounds = array<i64: 1>, scalar_prefetch = 0 : i64, scratch_operands = 0 : i64, tpu.core_type = #tpu.core_type<tc>, window_params = [{pipeline_mode = #tpu.pipeline_mode<synchronous>, transform_indices = @transform_0, window_bounds = array<i64: 16, 32>}, {transform_indices = @transform_1, window_bounds = array<i64: 32, 8>}, {transform_indices = @transform_2, window_bounds = array<i64: 32, 8>}, {transform_indices = @transform_3, window_bounds = array<i64: 1, 8>}]} {
    %c0 = arith.constant 0 : index
    %c0_0 = arith.constant 0 : index
    %0 = vector.load %arg2[%c0, %c0_0] : memref<32x8xf32, #tpu.memory_space<vmem>>, vector<32x8xf32>
    %c0_1 = arith.constant 0 : index
    %c0_2 = arith.constant 0 : index
    %1 = vector.load %arg3[%c0_1, %c0_2] : memref<32x8xf32, #tpu.memory_space<vmem>>, vector<32x8xf32>
    %2 = tpu.concatenate %0, %1 in 1 : vector<32x8xf32>, vector<32x8xf32> -> vector<32x16xf32>
    %cst = arith.constant 0.000000e+00 : f32
    %3 = vector.broadcast %cst : f32 to vector<1x16xf32>
    %c0_3 = arith.constant 0 : index
    %c0_4 = arith.constant 0 : index
    %4 = vector.load %arg1[%c0_3, %c0_4] : memref<16x32xf32, #tpu.memory_space<vmem>>, vector<16x32xf32>
    %cst_5 = arith.constant dense<0.000000e+00> : vector<16x16xf32>
    %5 = tpu.matmul %4, %2, %cst_5 {dimension_numbers = #tpu.dot_dimension_numbers<[1], [0], [0], [1], [0, 0, 1, 1], [], []>} : vector<16x32xf32>, vector<32x16xf32>, vector<16x16xf32> -> vector<16x16xf32>
    %cst_6 = arith.constant 1.000000e+01 : f32
    %6 = vector.broadcast %cst_6 : f32 to vector<16x16xf32>
    %7 = arith.subf %5, %6 : vector<16x16xf32>
    %8 = math.exp %7 : vector<16x16xf32>
    %cst_7 = arith.constant dense<0.000000e+00> : vector<16xf32>
    %9 = vector.multi_reduction <add>, %8, %cst_7 [0] : vector<16x16xf32> to vector<16xf32>
    %10 = vector.shape_cast %9 : vector<16xf32> to vector<1x16xf32>
    %11 = arith.addf %3, %10 : vector<1x16xf32>
    %12 = arith.mulf %0, %1 : vector<32x8xf32>
    %cst_8 = arith.constant dense<0.000000e+00> : vector<8xf32>
    %13 = vector.multi_reduction <add>, %12, %cst_8 [0] : vector<32x8xf32> to vector<8xf32>
    %14 = vector.shape_cast %13 : vector<8xf32> to vector<1x8xf32>
    %cst_9 = arith.constant 1.000000e+01 : f32
    %15 = vector.broadcast %cst_9 : f32 to vector<1x8xf32>
    %16 = arith.subf %14, %15 : vector<1x8xf32>
    %17 = math.exp %16 : vector<1x8xf32>
    %18 = vector.extract_strided_slice %11 {offsets = [0, 0], sizes = [1, 8], strides = [1, 1]} : vector<1x16xf32> to vector<1x8xf32>
    %19 = arith.subf %18, %17 : vector<1x8xf32>
    %20 = vector.extract_strided_slice %11 {offsets = [0, 8], sizes = [1, 8], strides = [1, 1]} : vector<1x16xf32> to vector<1x8xf32>
    %21 = arith.subf %20, %17 : vector<1x8xf32>
    %22 = math.log %19 : vector<1x8xf32>
    %23 = math.log %21 : vector<1x8xf32>
    %24 = arith.addf %22, %23 : vector<1x8xf32>
    %cst_10 = arith.constant 2.000000e+01 : f32
    %25 = vector.broadcast %cst_10 : f32 to vector<1x8xf32>
    %26 = arith.addf %24, %25 : vector<1x8xf32>
    %cst_11 = arith.constant 2.000000e+00 : f32
    %27 = vector.broadcast %cst_11 : f32 to vector<1x8xf32>
    %28 = arith.mulf %27, %14 : vector<1x8xf32>
    %29 = arith.subf %26, %28 : vector<1x8xf32>
    %cst_12 = arith.constant 6.250000e-02 : f32
    %30 = vector.broadcast %cst_12 : f32 to vector<1x8xf32>
    %31 = arith.mulf %29, %30 : vector<1x8xf32>
    %c0_13 = arith.constant 0 : index
    %c0_14 = arith.constant 0 : index
    %32 = vector.load %arg4[%c0_13, %c0_14] : memref<1x8xf32, #tpu.memory_space<vmem>>, vector<1x8xf32>
    tpu.vector_store %arg4[%c0_13, %c0_14], %31 {strides = array<i32>} : memref<1x8xf32, #tpu.memory_space<vmem>>, vector<1x8xf32>,
    return
  }
  func.func @transform_0(%arg0: i32) -> (i32, i32) {
    %c0_i32 = arith.constant 0 : i32
    %c0_i32_0 = arith.constant 0 : i32
    %c0_i32_1 = arith.constant 0 : i32
    return %c0_i32, %c0_i32_0 : i32, i32
  }
  func.func @transform_1(%arg0: i32) -> (i32, i32) {
    %c0_i32 = arith.constant 0 : i32
    %c0_i32_0 = arith.constant 0 : i32
    return %c0_i32, %arg0 : i32, i32
  }
  func.func @transform_2(%arg0: i32) -> (i32, i32) {
    %c0_i32 = arith.constant 0 : i32
    %c0_i32_0 = arith.constant 0 : i32
    return %c0_i32, %arg0 : i32, i32
  }
  func.func @transform_3(%arg0: i32) -> (i32, i32) {
    %c0_i32 = arith.constant 0 : i32
    %c0_i32_0 = arith.constant 0 : i32
    return %c0_i32, %arg0 : i32, i32
  }
}

</mosaic_0001>

<llo_original>
// kernel: tpu_custom_call.1
$region0: #{tpu_custom_call.1}
  #allocation0 [shape = 'u32[]', space=smem, size = 0x4, offset = 0x4, fixed_abs, tag = 'smem constant byte address 0x4 - core index']
  #allocation1 [shape = 'u32[72,128]{1,0:T(1,128)}', space=vmem, size = 0x9000, scoped, tag = 'internal scratch']
  %s0 = inlined_call_operand.vmem [shape: f32[16,32], index: 0, kind: input, shape index: {}]
  %s1 = inlined_call_operand.vmem [shape: f32[32,8], index: 1, kind: input, shape index: {}]
  %s2 = inlined_call_operand.vmem [shape: f32[32,8], index: 2, kind: input, shape index: {}]
  %s3 = inlined_call_operand.hbm [shape: f32[1,8], index: 3, kind: output, shape index: {}]
  %s4 = sld [smem:[#allocation0]]
  $region22: #{tpu_custom_call.1} parent=0
    _
  %s6 = ssub.s32 1, %s4
  %s7 = scalar_select 0, %s6, %s4
  $region1: #{tpu_custom_call.1} parent=0
    #allocation2 [shape = 'u8[512]{0}', space=vmem, size = 0x400, scoped, tag = 'output window, operand 0, single buffered']
    #allocation3 [shape = 's32[1]{0}', space=sflag, size = 0x4, scoped, tag = 'scoped memory for tpu_custom_call.1']
    %8 = vsyncpa [#allocation3], 0
    // Predicated region
    $region2: #{tpu_custom_call.1} parent=1 // pred_check
      _
    $region3: #{tpu_custom_call.1} parent=1 // pred_check_branch
      %10 = sbr.rel (0) target = $region5
    $region4: #{tpu_custom_call.1} parent=1 // pred_region
      _
    $region5: #{tpu_custom_call.1} parent=1 // pred_fallthru
      _
    // Predicated region
    $region6: #{tpu_custom_call.1} parent=1 // pred_check
      _
    $region7: #{tpu_custom_call.1} parent=1 // pred_check_branch
      %12 = sbr.rel (0) target = $region9
    $region8: #{tpu_custom_call.1} parent=1 // pred_region
      _
    $region9: #{tpu_custom_call.1} parent=1 // pred_fallthru
      _
    // Predicated region
    $region10: #{tpu_custom_call.1} parent=1 // pred_check
      _
    $region11: #{tpu_custom_call.1} parent=1 // pred_check_branch
      %14 = sbr.rel (0) target = $region13
    $region12: #{tpu_custom_call.1} parent=1 // pred_region
      _
    $region13: #{tpu_custom_call.1} parent=1 // pred_fallthru
      _
    %v15 = vld [vmem:[%s1] sm:$0xff]
    %v16 = vld [vmem:[%s1 + $0x8] sm:$0xff]
    %v17 = vld [vmem:[%s1 + $0x10] sm:$0xff]
    %v18 = vld [vmem:[%s1 + $0x18] sm:$0xff]
    %v19 = vld [vmem:[%s2] sm:$0xff]
    %v20 = vld [vmem:[%s2 + $0x8] sm:$0xff]
    %v21 = vld [vmem:[%s2 + $0x10] sm:$0xff]
    %v22 = vld [vmem:[%s2 + $0x18] sm:$0xff]
    %27 = vrot.lane.b32.xlu0 %v19, 8
    %v28 = vpop.permute.xlu0 %27
    %29 = vrot.lane.b32.xlu0 %v20, 8
    %v30 = vpop.permute.xlu0 %29
    %31 = vrot.lane.b32.xlu0 %v21, 8
    %v32 = vpop.permute.xlu0 %31
    %33 = vrot.lane.b32.xlu0 %v22, 8
    %v34 = vpop.permute.xlu0 %33
    %vm39 = vcmask 64512
    %v40 = vsel %vm39, %v15, %v28
    %v41 = vsel %vm39, %v16, %v30
    %v42 = vsel %vm39, %v17, %v32
    %v43 = vsel %vm39, %v18, %v34
    %v44 = vld [vmem:[%s0] sm:$0xff]
    %v45 = vld [vmem:[%s0 + $0x8] sm:$0xff]
    %vm46 = vcmask 261120
    %v48 = vsel %vm46, %v44, 0
    %v51 = vsel %vm46, %v45, 0
    %53 = vmatpush.msra.mxu0 0.0
    %54 = vmatpush.msra.mxu0 0.0
    %55 = vmatpush.msra.mxu0 0.0
    %56 = vmatpush.msra.mxu0 0.0
    %57 = vmatpush.msra.mxu0 0.0
    %58 = vmatpush.msra.mxu0 0.0
    %59 = vmatpush.msra.mxu0 0.0
    %60 = vmatpush.msra.mxu0 0.0
    %61 = vmatpush.msra.mxu0 0.0
    %62 = vmatpush.msra.mxu0 0.0
    %63 = vmatpush.msra.mxu0 0.0
    %64 = vmatpush.msra.mxu0 0.0
    %65 = vmatpush.msra.mxu0 %v43
    %66 = vmatpush.msra.mxu0 %v42
    %67 = vmatpush.msra.mxu0 %v41
    %68 = vmatpush.msra.mxu0 %v40
    %69 = vmatmul.f32.gmra.mxu0 %v48
    %v70 = vpop.f32.mrf.mxu0
    %v71 = vadd.f32 0.0, %v70
    %72 = vmatmul.f32.gmra.mxu0 %v51
    %v73 = vpop.f32.mrf.mxu0
    %v74 = vadd.f32 0.0, %v73
    %75 = vdwg.mxu0
    %v76 = vsub.f32 %v71, 10.0
    %v77 = vsub.f32 %v74, 10.0
    %v78 = vmul.f32 %v76, 1.442695
    %v79 = vpow.pop %v78
    %v80 = vmul.f32 %v77, 1.442695
    %v81 = vpow.pop %v80
    %vm82 = vcmask 130048
    %v83 = vsel %vm82, %v79, 0.0
    %v84 = vsel %vm82, %v81, 0.0
    %v85 = vadd.f32 %v83, %v84
    %v86 = vrot.slane %v85, 4
    %v87 = vadd.f32 %v85, %v86
    %v88 = vrot.slane %v87, 2
    %v89 = vadd.f32 %v87, %v88
    %v90 = vrot.slane %v89, 1
    %v91 = vadd.f32 %v89, %v90
    %v92 = vadd.f32 %v91, 0.0
    %v93 = vmul.f32 %v15, %v19
    %v94 = vmul.f32 %v16, %v20
    %v95 = vmul.f32 %v17, %v21
    %v96 = vmul.f32 %v18, %v22
    %v97 = vsel %vm39, %v93, 0.0
    %v98 = vsel %vm39, %v94, 0.0
    %v99 = vadd.f32 %v97, %v98
    %v100 = vsel %vm39, %v95, 0.0
    %v101 = vadd.f32 %v99, %v100
    %v102 = vsel %vm39, %v96, 0.0
    %v103 = vadd.f32 %v101, %v102
    %v104 = vrot.slane %v103, 4
    %v105 = vadd.f32 %v103, %v104
    %v106 = vrot.slane %v105, 2
    %v107 = vadd.f32 %v105, %v106
    %v108 = vrot.slane %v107, 1
    %v109 = vadd.f32 %v107, %v108
    %v110 = vsub.f32 %v109, 10.0
    %v111 = vmul.f32 %v110, 1.442695
    %v112 = vpow.pop %v111
    %v113 = vsub.f32 %v92, %v112
    %115 = vrot.lane.b32.xlu0 %v112, 8
    %v116 = vpop.permute.xlu0 %115
    %v118 = vsub.f32 %v92, %v116
    %v119 = vlog2.pop %v113
    %v120 = vmul.f32 %v119, 0.6931472
    %v121 = vlog2.pop %v118
    %v122 = vmul.f32 %v121, 0.6931472
    %124 = vrot.lane.b32.xlu0 %v122, 120
    %v125 = vpop.permute.xlu0 %124
    %v127 = vadd.f32 %v120, %v125
    %v128 = vadd.f32 %v127, 20.0
    %v129 = vmul.f32 %v109, 2.0
    %v130 = vsub.f32 %v128, %v129
    %v131 = vmul.f32 %v130, 0.0625
    %vm132 = vcmask 57344
    %133 = vst.msk [vmem:[#allocation2] sm:$0x1] %vm132, %v131
    // Predicated region
    $region14: #{tpu_custom_call.1} parent=1 // pred_check
      _
    $region15: #{tpu_custom_call.1} parent=1 // pred_check_branch
      %135 = sbr.rel (0) target = $region17
    $region16: #{tpu_custom_call.1} parent=1 // pred_region
      %137 = vsyncadd [#allocation3], 0
      %s139 = sshll.u32 [#allocation2], 4
      %s140 = int_to_ptr.vmem [resolvable:$true] %s139
      %s141 = sshll.u32 %s3, 4
      %s142 = int_to_ptr.hbm [resolvable:$true] %s141
      %144 = dma.vmem_to_hbm [thread:$0]  %s140, 16, %s142, [#allocation3]
    $region17: #{tpu_custom_call.1} parent=1 // pred_fallthru
      _
    // Predicated region
    $region18: #{tpu_custom_call.1} parent=1 // pred_check
      _
    $region19: #{tpu_custom_call.1} parent=1 // pred_check_branch
      %146 = sbr.rel (0) target = $region21
    $region20: #{tpu_custom_call.1} parent=1 // pred_region
      %148 = dma.done [#allocation3], 16
    $region21: #{tpu_custom_call.1} parent=1 // pred_fallthru
      _
    %149 = vsyncpa [#allocation3], 1

// kernel: tpu_custom_call.1
$region0: #{tpu_custom_call.1}
  #allocation0 [shape = 'u32[]', space=smem, size = 0x4, offset = 0x4, fixed_abs, tag = 'smem constant byte address 0x4 - core index']
  #allocation1 [shape = 'u32[72,128]{1,0:T(1,128)}', space=vmem, size = 0x9000, scoped, tag = 'internal scratch']
  %s0 = inlined_call_operand.vmem [shape: f32[16,32], index: 0, kind: input, shape index: {}]
  %s1 = inlined_call_operand.vmem [shape: f32[32,8], index: 1, kind: input, shape index: {}]
  %s2 = inlined_call_operand.vmem [shape: f32[32,8], index: 2, kind: input, shape index: {}]
  %s3 = inlined_call_operand.hbm [shape: f32[1,8], index: 3, kind: output, shape index: {}]
  %s4 = sld [smem:[#allocation0]]
  $region22: #{tpu_custom_call.1} parent=0
    _
  %s6 = ssub.s32 1, %s4
  %s7 = scalar_select 0, %s6, %s4
  $region1: #{tpu_custom_call.1} parent=0
    #allocation2 [shape = 'u8[512]{0}', space=vmem, size = 0x400, scoped, tag = 'output window, operand 0, single buffered']
    #allocation3 [shape = 's32[1]{0}', space=sflag, size = 0x4, scoped, tag = 'scoped memory for tpu_custom_call.1']
    %8 = vsyncpa [#allocation3], 0
    // Predicated region
    $region2: #{tpu_custom_call.1} parent=1 // pred_check
      _
    $region3: #{tpu_custom_call.1} parent=1 // pred_check_branch
      %10 = sbr.rel (0) target = $region5
    $region4: #{tpu_custom_call.1} parent=1 // pred_region
      _
    $region5: #{tpu_custom_call.1} parent=1 // pred_fallthru
      _
    // Predicated region
    $region6: #{tpu_custom_call.1} parent=1 // pred_check
      _
    $region7: #{tpu_custom_call.1} parent=1 // pred_check_branch
      %12 = sbr.rel (0) target = $region9
    $region8: #{tpu_custom_call.1} parent=1 // pred_region
      _
    $region9: #{tpu_custom_call.1} parent=1 // pred_fallthru
      _
    // Predicated region
    $region10: #{tpu_custom_call.1} parent=1 // pred_check
      _
    $region11: #{tpu_custom_call.1} parent=1 // pred_check_branch
      %14 = sbr.rel (0) target = $region13
    $region12: #{tpu_custom_call.1} parent=1 // pred_region
      _
    $region13: #{tpu_custom_call.1} parent=1 // pred_fallthru
      _
    %v15 = vld [vmem:[%s1] sm:$0xff]
    %v16 = vld [vmem:[%s1 + $0x8] sm:$0xff]
    %v17 = vld [vmem:[%s1 + $0x10] sm:$0xff]
    %v18 = vld [vmem:[%s1 + $0x18] sm:$0xff]
    %v19 = vld [vmem:[%s2] sm:$0xff]
    %v20 = vld [vmem:[%s2 + $0x8] sm:$0xff]
    %v21 = vld [vmem:[%s2 + $0x10] sm:$0xff]
    %v22 = vld [vmem:[%s2 + $0x18] sm:$0xff]
    %27 = vrot.lane.b32.xlu0 %v19, 8
    %v28 = vpop.permute.xlu0 %27
    %29 = vrot.lane.b32.xlu0 %v20, 8
    %v30 = vpop.permute.xlu0 %29
    %31 = vrot.lane.b32.xlu0 %v21, 8
    %v32 = vpop.permute.xlu0 %31
    %33 = vrot.lane.b32.xlu0 %v22, 8
    %v34 = vpop.permute.xlu0 %33
    %vm39 = vcmask 64512
    %v40 = vsel %vm39, %v15, %v28
    %v41 = vsel %vm39, %v16, %v30
    %v42 = vsel %vm39, %v17, %v32
    %v43 = vsel %vm39, %v18, %v34
    %v44 = vld [vmem:[%s0] sm:$0xff]
    %v45 = vld [vmem:[%s0 + $0x8] sm:$0xff]
    %vm46 = vcmask 261120
    %v48 = vsel %vm46, %v44, 0
    %v51 = vsel %vm46, %v45, 0
    %53 = vmatpush.msra.mxu0 0.0
    %54 = vmatpush.msra.mxu0 0.0
    %55 = vmatpush.msra.mxu0 0.0
    %56 = vmatpush.msra.mxu0 0.0
    %57 = vmatpush.msra.mxu0 0.0
    %58 = vmatpush.msra.mxu0 0.0
    %59 = vmatpush.msra.mxu0 0.0
    %60 = vmatpush.msra.mxu0 0.0
    %61 = vmatpush.msra.mxu0 0.0
    %62 = vmatpush.msra.mxu0 0.0
    %63 = vmatpush.msra.mxu0 0.0
    %64 = vmatpush.msra.mxu0 0.0
    %65 = vmatpush.msra.mxu0 %v43
    %66 = vmatpush.msra.mxu0 %v42
    %67 = vmatpush.msra.mxu0 %v41
    %68 = vmatpush.msra.mxu0 %v40
    %69 = vmatmul.f32.gmra.mxu0 %v48
    %v70 = vpop.f32.mrf.mxu0
    %v71 = vadd.f32 0.0, %v70
    %72 = vmatmul.f32.gmra.mxu0 %v51
    %v73 = vpop.f32.mrf.mxu0
    %v74 = vadd.f32 0.0, %v73
    %75 = vdwg.mxu0
    %v76 = vsub.f32 %v71, 10.0
    %v77 = vsub.f32 %v74, 10.0
    %v78 = vmul.f32 %v76, 1.442695
    %v79 = vpow.pop %v78
    %v80 = vmul.f32 %v77, 1.442695
    %v81 = vpow.pop %v80
    %vm82 = vcmask 130048
    %v83 = vsel %vm82, %v79, 0.0
    %v84 = vsel %vm82, %v81, 0.0
    %v85 = vadd.f32 %v83, %v84
    %v86 = vrot.slane %v85, 4
    %v87 = vadd.f32 %v85, %v86
    %v88 = vrot.slane %v87, 2
    %v89 = vadd.f32 %v87, %v88
    %v90 = vrot.slane %v89, 1
    %v91 = vadd.f32 %v89, %v90
    %v92 = vadd.f32 %v91, 0.0
    %v93 = vmul.f32 %v15, %v19
    %v94 = vmul.f32 %v16, %v20
    %v95 = vmul.f32 %v17, %v21
    %v96 = vmul.f32 %v18, %v22
    %v97 = vsel %vm39, %v93, 0.0
    %v98 = vsel %vm39, %v94, 0.0
    %v99 = vadd.f32 %v97, %v98
    %v100 = vsel %vm39, %v95, 0.0
    %v101 = vadd.f32 %v99, %v100
    %v102 = vsel %vm39, %v96, 0.0
    %v103 = vadd.f32 %v101, %v102
    %v104 = vrot.slane %v103, 4
    %v105 = vadd.f32 %v103, %v104
    %v106 = vrot.slane %v105, 2
    %v107 = vadd.f32 %v105, %v106
    %v108 = vrot.slane %v107, 1
    %v109 = vadd.f32 %v107, %v108
    %v110 = vsub.f32 %v109, 10.0
    %v111 = vmul.f32 %v110, 1.442695
    %v112 = vpow.pop %v111
    %v113 = vsub.f32 %v92, %v112
    %115 = vrot.lane.b32.xlu0 %v112, 8
    %v116 = vpop.permute.xlu0 %115
    %v118 = vsub.f32 %v92, %v116
    %v119 = vlog2.pop %v113
    %v120 = vmul.f32 %v119, 0.6931472
    %v121 = vlog2.pop %v118
    %v122 = vmul.f32 %v121, 0.6931472
    %124 = vrot.lane.b32.xlu0 %v122, 120
    %v125 = vpop.permute.xlu0 %124
    %v127 = vadd.f32 %v120, %v125
    %v128 = vadd.f32 %v127, 20.0
    %v129 = vmul.f32 %v109, 2.0
    %v130 = vsub.f32 %v128, %v129
    %v131 = vmul.f32 %v130, 0.0625
    %vm132 = vcmask 57344
    %133 = vst.msk [vmem:[#allocation2] sm:$0x1] %vm132, %v131
    // Predicated region
    $region14: #{tpu_custom_call.1} parent=1 // pred_check
      _
    $region15: #{tpu_custom_call.1} parent=1 // pred_check_branch
      %135 = sbr.rel (0) target = $region17
    $region16: #{tpu_custom_call.1} parent=1 // pred_region
      %137 = vsyncadd [#allocation3], 0
      %s139 = sshll.u32 [#allocation2], 4
      %s140 = int_to_ptr.vmem [resolvable:$true] %s139
      %s141 = sshll.u32 %s3, 4
      %s142 = int_to_ptr.hbm [resolvable:$true] %s141
      %144 = dma.vmem_to_hbm [thread:$0]  %s140, 16, %s142, [#allocation3]
    $region17: #{tpu_custom_call.1} parent=1 // pred_fallthru
      _
    // Predicated region
    $region18: #{tpu_custom_call.1} parent=1 // pred_check
      _
    $region19: #{tpu_custom_call.1} parent=1 // pred_check_branch
      %146 = sbr.rel (0) target = $region21
    $region20: #{tpu_custom_call.1} parent=1 // pred_region
      %148 = dma.done [#allocation3], 16
    $region21: #{tpu_custom_call.1} parent=1 // pred_fallthru
      _
    %149 = vsyncpa [#allocation3], 1

</llo_original>
